<compile_context>
chip_gen: v6e
topology: v6e:2x2x1
jax: 0.10.0
libtpu: 0.0.40
codegen_flags: <defaults>
</compile_context>

<pallas_src>
import functools

import jax
import jax.numpy as jnp
from jax.experimental import pallas as pl
from jax.experimental.pallas import tpu as pltpu


def _round_up(x, m):
    return (x + m - 1) // m * m


def _proj_kernel(p_ref, w_ref, b_ref, o_ref):
    # p_ref: (tm, Kp) patches      w_ref: (Kp, Ep) weight (resident, full E)
    # b_ref: (1, Ep)  f32 bias     o_ref: (tm, Ep) output
    acc = jnp.dot(p_ref[...], w_ref[...], preferred_element_type=jnp.float32)
    o_ref[...] = (acc + b_ref[...]).astype(o_ref.dtype)


def patch_embed(x, weight, bias, patch_size, *, tm=512,
                compute_dtype=jnp.bfloat16, out_dtype=jnp.float32):
    """x: (B, C, H, W) f32.  weight: (E, C, p, p) f32.  bias: (E,) f32.

    Returns (B, N, E) `out_dtype` with N = (H//p)*(W//p), matching
    Conv2d(C, E, p, stride=p)(x).flatten(2).transpose(1, 2).

    compute_dtype=bf16 uses the MXU fast path (f32 accumulation); pass
    jnp.float32 for strict parity with PyTorch's f32 conv.
    """
    B, C, H, W = x.shape
    E = weight.shape[0]
    p = patch_size
    Hp, Wp = H // p, W // p
    N = Hp * Wp
    K = C * p * p
    M = B * N

    # ---- lane-dense, MXU-friendly padded / tiled sizes -------------------
    Kp = _round_up(K, 128)                 # contraction dim, kept whole
    Ep = _round_up(E, 128)                 # full E: one resident weight tile
    # M tile: multiple of 16 (bf16 native sublane tile), prefer multiples of 256.
    tm = max(16, min(tm, _round_up(M, 16)))
    if tm >= 256:
        tm = (tm // 256) * 256
    else:
        tm = _round_up(tm, 16)

    in_item = jnp.dtype(compute_dtype).itemsize
    out_item = jnp.dtype(out_dtype).itemsize

    def vmem_need(tm_):
        return (2 * tm_ * Kp * in_item      # patches, double-buffered
                + 2 * tm_ * Ep * out_item   # output, double-buffered
                + 2 * Kp * Ep * in_item     # weight buffers (fetched once)
                + 2 * Ep * 4)               # bias

    # Shrink tm only if the footprint would get uncomfortably large.
    while tm > 256 and vmem_need(tm) > 48 * 1024 * 1024:
        tm //= 2
    Mp = _round_up(M, tm)
    vmem_limit = int(min(max(vmem_need(tm) + (16 << 20), 32 << 20), 64 << 20))

    # ---- glue: patch extraction + cast + zero-pad (one fused XLA op) ------
    patches = x.reshape(B, C, Hp, p, Wp, p)
    patches = patches.transpose(0, 2, 4, 1, 3, 5).reshape(M, K)   # (c, i, j) order
    patches = jnp.pad(patches, ((0, Mp - M), (0, Kp - K))).astype(compute_dtype)

    # conv weight (E, C, p, p) -> (K, E), zero-padded
    w = weight.reshape(E, K).T
    w = jnp.pad(w, ((0, Kp - K), (0, Ep - E))).astype(compute_dtype)
    b = jnp.pad(bias, (0, Ep - E)).reshape(1, Ep).astype(jnp.float32)

    cost = pl.CostEstimate(
        flops=2 * Mp * Kp * Ep,
        transcendentals=0,
        bytes_accessed=(Mp * Kp * in_item + Kp * Ep * in_item + Ep * 4
                        + Mp * Ep * out_item),
    )

    out = pl.pallas_call(
        _proj_kernel,
        out_shape=jax.ShapeDtypeStruct((Mp, Ep), out_dtype),
        grid_spec=pltpu.PrefetchScalarGridSpec(
            num_scalar_prefetch=0,
            grid=(Mp // tm,),                                  # 1-D grid over M
            in_specs=[
                pl.BlockSpec((tm, Kp), lambda m: (m, 0)),      # patches: streamed once
                # Weight / bias block indices never change -> DMA'd once, resident.
                # TODO(synk): on v7x, pipeline_mode=pl.Buffered(1) here would drop
                # the dead second weight buffer and fund Buffered(3) on patches.
                pl.BlockSpec((Kp, Ep), lambda m: (0, 0)),
                pl.BlockSpec((1, Ep), lambda m: (0, 0)),
            ],
            out_specs=pl.BlockSpec((tm, Ep), lambda m: (m, 0)),
        ),
        compiler_params=pltpu.CompilerParams(
            dimension_semantics=("parallel",),   # many M tiles -> 2-TC balance on v7x
            vmem_limit_bytes=vmem_limit,
        ),
        cost_estimate=cost,
    )(patches, w, b)

    return out[:M, :E].reshape(B, N, E)


if __name__ == "__main__":
    # Module hyper-params (small, consistent with PatchEmbed)
    img_size = 16
    patch_size = 4
    in_chan = 4
    embed_dim = 32
    batch = 2

    key = jax.random.PRNGKey(0)
    kx, kw, kb = jax.random.split(key, 3)

    x = jax.random.normal(kx, (batch, in_chan, img_size, img_size), jnp.float32)
    # Deterministic synthetic Conv2d parameters (shapes from nn.Conv2d.__init__)
    weight = jax.random.normal(
        kw, (embed_dim, in_chan, patch_size, patch_size), jnp.float32) * 0.02
    bias = jax.random.normal(kb, (embed_dim,), jnp.float32) * 0.02

    fwd = jax.jit(functools.partial(patch_embed, patch_size=patch_size))
    out = jax.block_until_ready(fwd(x, weight, bias))

    # sanity: shape (B, n_patches, embed_dim)
    n_patches = (img_size // patch_size) ** 2
    assert out.shape == (batch, n_patches, embed_dim), out.shape

    # correctness check against XLA conv reference (kernel matmul is bf16 ->
    # tolerance loosened accordingly; pass compute_dtype=f32 for strict parity)
    ref = jax.lax.conv_general_dilated(
        x, weight, window_strides=(patch_size, patch_size), padding="VALID",
        dimension_numbers=("NCHW", "OIHW", "NCHW"))
    ref = ref + bias[None, :, None, None]
    ref = ref.reshape(batch, embed_dim, n_patches).transpose(0, 2, 1)
    err = float(jnp.max(jnp.abs(out - ref)))
    assert jnp.allclose(out, ref, atol=2e-2, rtol=2e-2), err

    print("KERNEL_OK")
</pallas_src>

<mosaic_0001>
module attributes {stable_mosaic.version = 11 : i64} {
  func.func @_proj_kernel(%arg0: i32, %arg1: memref<32x128xbf16, #tpu.memory_space<vmem>>, %arg2: memref<128x128xbf16, #tpu.memory_space<vmem>>, %arg3: memref<1x128xf32, #tpu.memory_space<vmem>>, %arg4: memref<32x128xf32, #tpu.memory_space<vmem>>) attributes {dimension_semantics = [#tpu.dimension_semantics<parallel>], iteration_bounds = array<i64: 1>, scalar_prefetch = 0 : i64, scratch_operands = 0 : i64, tpu.core_type = #tpu.core_type<tc>, window_params = [{transform_indices = @transform_0, window_bounds = array<i64: 32, 128>}, {pipeline_mode = #tpu.pipeline_mode<synchronous>, transform_indices = @transform_1, window_bounds = array<i64: 128, 128>}, {pipeline_mode = #tpu.pipeline_mode<synchronous>, transform_indices = @transform_2, window_bounds = array<i64: 1, 128>}, {transform_indices = @transform_3, window_bounds = array<i64: 32, 128>}]} {
    %c0 = arith.constant 0 : index
    %c0_0 = arith.constant 0 : index
    %0 = vector.load %arg1[%c0, %c0_0] : memref<32x128xbf16, #tpu.memory_space<vmem>>, vector<32x128xbf16>
    %c0_1 = arith.constant 0 : index
    %c0_2 = arith.constant 0 : index
    %1 = vector.load %arg2[%c0_1, %c0_2] : memref<128x128xbf16, #tpu.memory_space<vmem>>, vector<128x128xbf16>
    %cst = arith.constant dense<0.000000e+00> : vector<32x128xf32>
    %2 = tpu.matmul %0, %1, %cst {dimension_numbers = #tpu.dot_dimension_numbers<[1], [0], [0], [1], [0, 0, 1, 1], [], []>} : vector<32x128xbf16>, vector<128x128xbf16>, vector<32x128xf32> -> vector<32x128xf32>
    %c0_3 = arith.constant 0 : index
    %c0_4 = arith.constant 0 : index
    %3 = vector.load %arg3[%c0_3, %c0_4] : memref<1x128xf32, #tpu.memory_space<vmem>>, vector<1x128xf32>
    %4 = vector.broadcast %3 : vector<1x128xf32> to vector<32x128xf32>
    %5 = arith.addf %2, %4 : vector<32x128xf32>
    %c0_5 = arith.constant 0 : index
    %c0_6 = arith.constant 0 : index
    %6 = vector.load %arg4[%c0_5, %c0_6] : memref<32x128xf32, #tpu.memory_space<vmem>>, vector<32x128xf32>
    tpu.vector_store %arg4[%c0_5, %c0_6], %5 {strides = array<i32>} : memref<32x128xf32, #tpu.memory_space<vmem>>, vector<32x128xf32>,
    return
  }
  func.func @transform_0(%arg0: i32) -> (i32, i32) {
    %c0_i32 = arith.constant 0 : i32
    %c0_i32_0 = arith.constant 0 : i32
    return %arg0, %c0_i32 : i32, i32
  }
  func.func @transform_1(%arg0: i32) -> (i32, i32) {
    %c0_i32 = arith.constant 0 : i32
    %c0_i32_0 = arith.constant 0 : i32
    %c0_i32_1 = arith.constant 0 : i32
    return %c0_i32, %c0_i32_0 : i32, i32
  }
  func.func @transform_2(%arg0: i32) -> (i32, i32) {
    %c0_i32 = arith.constant 0 : i32
    %c0_i32_0 = arith.constant 0 : i32
    %c0_i32_1 = arith.constant 0 : i32
    return %c0_i32, %c0_i32_0 : i32, i32
  }
  func.func @transform_3(%arg0: i32) -> (i32, i32) {
    %c0_i32 = arith.constant 0 : i32
    %c0_i32_0 = arith.constant 0 : i32
    return %arg0, %c0_i32 : i32, i32
  }
}

</mosaic_0001>

<llo_original>
// kernel: patch_embed.1
$region0: #{patch_embed.1}
  #allocation0 [shape = 'u32[]', space=smem, size = 0x4, offset = 0x4, fixed_abs, tag = 'smem constant byte address 0x4 - core index']
  #allocation1 [shape = 'u32[144,128]{1,0:T(1,128)}', space=vmem, size = 0x12000, scoped, tag = 'internal scratch']
  %s0 = inlined_call_operand.vmem [shape: bf16[32,128], index: 0, kind: input, shape index: {}]
  %s1 = inlined_call_operand.vmem [shape: bf16[128,128], index: 1, kind: input, shape index: {}]
  %s2 = inlined_call_operand.vmem [shape: f32[1,128], index: 2, kind: input, shape index: {}]
  %s3 = inlined_call_operand.hbm [shape: f32[32,128], index: 3, kind: output, shape index: {}]
  %s4 = sld [smem:[#allocation0]]
  $region22: #{patch_embed.1} parent=0
    _
  %s6 = ssub.s32 1, %s4
  %s7 = scalar_select 0, %s6, %s4
  $region1: #{patch_embed.1} parent=0
    #allocation2 [shape = 'u8[16384]{0}', space=vmem, size = 0x4000, scoped, tag = 'output window, operand 0, single buffered']
    #allocation3 [shape = 's32[1]{0}', space=sflag, size = 0x4, scoped, tag = 'scoped memory for patch_embed.1']
    %8 = vsyncpa [#allocation3], 0
    // Predicated region
    $region2: #{patch_embed.1} parent=1 // pred_check
      _
    $region3: #{patch_embed.1} parent=1 // pred_check_branch
      %10 = sbr.rel (0) target = $region5
    $region4: #{patch_embed.1} parent=1 // pred_region
      _
    $region5: #{patch_embed.1} parent=1 // pred_fallthru
      _
    // Predicated region
    $region6: #{patch_embed.1} parent=1 // pred_check
      _
    $region7: #{patch_embed.1} parent=1 // pred_check_branch
      %12 = sbr.rel (0) target = $region9
    $region8: #{patch_embed.1} parent=1 // pred_region
      _
    $region9: #{patch_embed.1} parent=1 // pred_fallthru
      _
    // Predicated region
    $region10: #{patch_embed.1} parent=1 // pred_check
      _
    $region11: #{patch_embed.1} parent=1 // pred_check_branch
      %14 = sbr.rel (0) target = $region13
    $region12: #{patch_embed.1} parent=1 // pred_region
      _
    $region13: #{patch_embed.1} parent=1 // pred_fallthru
      _
    %v16 = vld [vmem:[%s0] sm:$0xf]
    %v17 = vld [vmem:[%s0 + $0x4] sm:$0xf]
    %v18 = vld [vmem:[%s0 + $0x8] sm:$0xf]
    %v19 = vld [vmem:[%s0 + $0xc] sm:$0xf]
    %v20 = vld [vmem:[%s1] sm:$0xf]
    %v21 = vld [vmem:[%s1 + $0x4] sm:$0xf]
    %v22 = vld [vmem:[%s1 + $0x8] sm:$0xf]
    %v23 = vld [vmem:[%s1 + $0xc] sm:$0xf]
    %v24 = vld [vmem:[%s1 + $0x10] sm:$0xf]
    %v25 = vld [vmem:[%s1 + $0x14] sm:$0xf]
    %v26 = vld [vmem:[%s1 + $0x18] sm:$0xf]
    %v27 = vld [vmem:[%s1 + $0x1c] sm:$0xf]
    %v28 = vld [vmem:[%s1 + $0x20] sm:$0xf]
    %v29 = vld [vmem:[%s1 + $0x24] sm:$0xf]
    %v30 = vld [vmem:[%s1 + $0x28] sm:$0xf]
    %v31 = vld [vmem:[%s1 + $0x2c] sm:$0xf]
    %v32 = vld [vmem:[%s1 + $0x30] sm:$0xf]
    %v33 = vld [vmem:[%s1 + $0x34] sm:$0xf]
    %v34 = vld [vmem:[%s1 + $0x38] sm:$0xf]
    %v35 = vld [vmem:[%s1 + $0x3c] sm:$0xf]
    %v36 = vld [vmem:[%s2] sm:$0x1]
    %v38 = vlaneseq
    %v39 = vshrl.u32 %v38, 7
    %v40 = vsub.s32 0, %v39
    %v41 = vrot.slane %v36, %v40
    %v47 = vunpack.c.l.b16 %v16
    %v48 = vunpack.c.l.b16 %v17
    %v49 = vunpack.c.l.b16 %v18
    %v50 = vunpack.c.l.b16 %v19
    %v51 = vpack.c.b16 %v48, %v47
    %v52 = vpack.c.b16 %v50, %v49
    %v71 = vunpack.c.l.b16 %v20
    %v72 = vunpack.c.l.b16 %v21
    %v73 = vunpack.c.l.b16 %v22
    %v74 = vunpack.c.l.b16 %v23
    %v75 = vunpack.c.l.b16 %v24
    %v76 = vunpack.c.l.b16 %v25
    %v77 = vunpack.c.l.b16 %v26
    %v78 = vunpack.c.l.b16 %v27
    %v79 = vunpack.c.l.b16 %v28
    %v80 = vunpack.c.l.b16 %v29
    %v81 = vunpack.c.l.b16 %v30
    %v82 = vunpack.c.l.b16 %v31
    %v83 = vunpack.c.l.b16 %v32
    %v84 = vunpack.c.l.b16 %v33
    %v85 = vunpack.c.l.b16 %v34
    %v86 = vunpack.c.l.b16 %v35
    %v87 = vpack.c.b16 %v72, %v71
    %v88 = vpack.c.b16 %v74, %v73
    %v89 = vpack.c.b16 %v76, %v75
    %v90 = vpack.c.b16 %v78, %v77
    %v91 = vpack.c.b16 %v80, %v79
    %v92 = vpack.c.b16 %v82, %v81
    %v93 = vpack.c.b16 %v84, %v83
    %v94 = vpack.c.b16 %v86, %v85
    %103 = vmatprep.subr.bf16.mxu0 0
    %104 = vmatpush1.bf16.msra.mxu0 %v94
    %105 = vmatprep.subr.bf16.mxu0 0
    %106 = vmatpush1.bf16.msra.mxu0 %v93
    %107 = vmatprep.subr.bf16.mxu0 0
    %108 = vmatpush1.bf16.msra.mxu0 %v92
    %109 = vmatprep.subr.bf16.mxu0 0
    %110 = vmatpush1.bf16.msra.mxu0 %v91
    %111 = vmatprep.subr.bf16.mxu0 0
    %112 = vmatpush1.bf16.msra.mxu0 %v90
    %113 = vmatprep.subr.bf16.mxu0 0
    %114 = vmatpush1.bf16.msra.mxu0 %v89
    %115 = vmatprep.subr.bf16.mxu0 0
    %116 = vmatpush1.bf16.msra.mxu0 %v88
    %117 = vmatprep.subr.bf16.mxu0 0
    %118 = vmatpush1.bf16.msra.mxu0 %v87
    %119 = vmatprep.subr.bf16.mxu0 0
    %120 = vmatpush2.bf16.msra.mxu0 0
    %121 = vmatprep.subr.bf16.mxu0 0
    %122 = vmatpush2.bf16.msra.mxu0 0
    %123 = vmatprep.subr.bf16.mxu0 0
    %124 = vmatpush2.bf16.msra.mxu0 0
    %125 = vmatprep.subr.bf16.mxu0 0
    %126 = vmatpush2.bf16.msra.mxu0 0
    %127 = vmatprep.subr.bf16.mxu0 0
    %128 = vmatpush2.bf16.msra.mxu0 0
    %129 = vmatprep.subr.bf16.mxu0 0
    %130 = vmatpush2.bf16.msra.mxu0 0
    %131 = vmatprep.subr.bf16.mxu0 0
    %132 = vmatpush2.bf16.msra.mxu0 0
    %133 = vmatprep.subr.bf16.mxu0 0
    %134 = vmatpush2.bf16.msra.mxu0 0
    %135 = vmatprep.mubr.bf16.mxu0 0
    %136 = vmatmul.mubr.bf16.gmra.mxu0 %v51
    %v137 = vpop.f32.mrf.mxu0
    %v138 = vadd.f32 %v41, %v137
    %v139 = vpop.f32.mrf.mxu0
    %v140 = vpop.f32.mrf.mxu0
    %v141 = vadd.f32 %v41, %v140
    %v142 = vpop.f32.mrf.mxu0
    %143 = vmatprep.mubr.bf16.mxu0 0
    %144 = vmatmul.mubr.bf16.gmra.mxu0 %v52
    %v145 = vpop.f32.mrf.mxu0
    %v146 = vadd.f32 %v41, %v145
    %v147 = vpop.f32.mrf.mxu0
    %v148 = vpop.f32.mrf.mxu0
    %v149 = vadd.f32 %v41, %v148
    %v150 = vpop.f32.mrf.mxu0
    %151 = vdwg.mxu0
    %152 = vst [vmem:[#allocation2] sm:$0xff] %v138
    %153 = vst [vmem:[#allocation2 + $0x8] sm:$0xff] %v141
    %154 = vst [vmem:[#allocation2 + $0x10] sm:$0xff] %v146
    %155 = vst [vmem:[#allocation2 + $0x18] sm:$0xff] %v149
    // Predicated region
    $region14: #{patch_embed.1} parent=1 // pred_check
      _
    $region15: #{patch_embed.1} parent=1 // pred_check_branch
      %157 = sbr.rel (0) target = $region17
    $region16: #{patch_embed.1} parent=1 // pred_region
      %s159 = ssub.s32 512, 512
      %160 = vsyncadd [#allocation3], %s159
      %s161 = sshll.u32 [#allocation2], 4
      %s162 = int_to_ptr.vmem [resolvable:$true] %s161
      %167 = dma.vmem_to_hbm [thread:$0]  %s162, 512, %s3, [#allocation3], 128, 128, 8
    $region17: #{patch_embed.1} parent=1 // pred_fallthru
      _
    // Predicated region
    $region18: #{patch_embed.1} parent=1 // pred_check
      _
    $region19: #{patch_embed.1} parent=1 // pred_check_branch
      %169 = sbr.rel (0) target = $region21
    $region20: #{patch_embed.1} parent=1 // pred_region
      %170 = dma.done [#allocation3], 512
    $region21: #{patch_embed.1} parent=1 // pred_fallthru
      _
    %171 = vsyncpa [#allocation3], 1

</llo_original>
